<compile_context>
chip_gen: v6e
topology: v6e:2x2x1
jax: 0.10.0
libtpu: 0.0.40
codegen_flags: <defaults>
</compile_context>

<pallas_src>
import functools

import jax
import jax.numpy as jnp
from jax.experimental import pallas as pl
from jax.experimental.pallas import tpu as pltpu

BN_EPS = 1e-5
_VMEM_BUDGET = 24 * 1024 * 1024   # pipelined-buffer budget; safe on v7x 64 MiB/TC


def _round_up(x, m):
    return ((x + m - 1) // m) * m


def _conv_tile(x_ref, w_ref, *, l_tile, apply_relu):
    """y[c_out, l] = sum_k W[k] @ x[:, k : k + l_tile]  (f32 accumulation)."""
    k_taps, c_out, _ = w_ref.shape
    acc = jnp.zeros((c_out, l_tile), jnp.float32)
    for k in range(k_taps):                          # static unroll (K is small)
        xk = x_ref[0, :, pl.ds(k, l_tile)]           # static lane offset
        acc = acc + jnp.dot(w_ref[k], xk, preferred_element_type=jnp.float32)
    if apply_relu:
        acc = jnp.maximum(acc, 0.0)
    return acc


def _stats_kernel(x_ref, w_ref, sum_ref, sq_ref, *, l_tile, apply_relu):
    # Pass 1: conv + activation, per-tile partial sum / sum-of-squares.
    y = _conv_tile(x_ref, w_ref, l_tile=l_tile, apply_relu=apply_relu)
    sum_ref[...] = jnp.sum(y, axis=1, keepdims=True).reshape(sum_ref.shape)
    sq_ref[...] = jnp.sum(y * y, axis=1, keepdims=True).reshape(sq_ref.shape)


def _apply_kernel(x_ref, w_ref, scale_ref, shift_ref, o_ref, *, l_tile, apply_relu):
    # Pass 2: recompute conv + activation, apply folded BN scale/shift,
    # write straight into the (N, C_out, L_out) NCL output block.
    y = _conv_tile(x_ref, w_ref, l_tile=l_tile, apply_relu=apply_relu)
    out = y * scale_ref[...] + shift_ref[...]
    o_ref[...] = out.astype(o_ref.dtype).reshape(o_ref.shape)


def batchnorm_conv1d(x, weight, gamma, beta, *, stride, padding, apply_relu=True):
    """x: (N, C_in, L), weight: (C_out, C_in, K) -> (N, C_out, L_out) f32."""
    n, c_in, length = x.shape
    c_out, _, k = weight.shape
    l_out = (length + 2 * padding - k) // stride + 1
    m_count = n * l_out

    # bf16 MXU operands (f32 accumulation); BN math stays in f32.
    xb = x.astype(jnp.bfloat16)
    wb = weight.astype(jnp.bfloat16)

    lx = length + 2 * padding
    # Honest VMEM accounting for the resident path: double-buffered x block,
    # double-buffered weight, double-buffered f32 output block, f32 accumulator.
    resident_bytes = (2 * (c_in * lx * 2)
                      + 2 * (k * c_out * c_in * 2)
                      + 3 * (c_out * l_out * 4)
                      + 8 * c_out * 4)
    use_resident = (stride == 1) and (resident_bytes <= _VMEM_BUDGET)

    if use_resident:
        # --- Path A: no im2col; x read once per sample per pass. -------------
        x_in = jnp.pad(xb, ((0, 0), (0, 0), (padding, padding)))   # (N, C_in, Lx)
        w_in = jnp.transpose(wb, (2, 0, 1))                        # (K, C_out, C_in)
        grid = (n,)                          # batch on the parallel axis (megacore)
        n_lt, tl, l_out_pad = 1, l_out, l_out
        x_spec = pl.BlockSpec((1, c_in, lx), lambda i: (i, 0, 0))
        w_spec = pl.BlockSpec((k, c_out, c_in), lambda i: (0, 0, 0))
        vec_spec = pl.BlockSpec((c_out, 1), lambda i: (0, 0))
        stat_spec = pl.BlockSpec((1, 1, c_out, 1), lambda i: (i, 0, 0, 0))
        out_spec = pl.BlockSpec((1, c_out, l_out), lambda i: (i, 0, 0))
        est_vmem = resident_bytes
    else:
        # --- Path B: transposed im2col (CK on sublanes, L on lanes), L tiled. -
        ck = c_in * k
        w_bytes = 2 * (c_out * ck * 2)
        bytes_per_col = 2 * (ck * 2) + 2 * (c_out * 4) + c_out * 4
        max_cols = max(128, (_VMEM_BUDGET - w_bytes) // max(bytes_per_col, 1))
        if l_out <= max_cols:
            tl, l_out_pad = l_out, l_out
        else:
            tl = max(128, min((max_cols // 128) * 128, 4096))
            l_out_pad = _round_up(l_out, tl)
        n_lt = l_out_pad // tl

        needed = (l_out_pad - 1) * stride + k
        extra = max(0, needed - (length + 2 * padding))
        x_pad = jnp.pad(xb, ((0, 0), (0, 0), (padding, padding + extra)))
        idx = jnp.arange(k)[:, None] + jnp.arange(l_out_pad)[None, :] * stride
        xt = x_pad[:, :, idx].reshape(n, ck, l_out_pad)            # (N, CK, L_pad)
        if l_out_pad > l_out:
            # Zero padded columns so they contribute 0 to the BN statistics.
            xt = xt * (jnp.arange(l_out_pad) < l_out).astype(xt.dtype)
        x_in = xt
        w_in = wb.reshape(c_out, ck)[None]                         # (1, C_out, CK)
        grid = (n, n_lt)
        x_spec = pl.BlockSpec((1, ck, tl), lambda i, j: (i, 0, j))
        w_spec = pl.BlockSpec((1, c_out, ck), lambda i, j: (0, 0, 0))
        vec_spec = pl.BlockSpec((c_out, 1), lambda i, j: (0, 0))
        stat_spec = pl.BlockSpec((1, 1, c_out, 1), lambda i, j: (i, j, 0, 0))
        out_spec = pl.BlockSpec((1, c_out, tl), lambda i, j: (i, 0, j))
        est_vmem = w_bytes + bytes_per_col * tl + 8 * c_out * 4

    compiler_params = pltpu.CompilerParams(
        dimension_semantics=("parallel",) * len(grid),
        vmem_limit_bytes=int(min(48 * 1024 * 1024,
                                 max(32 * 1024 * 1024, 2 * est_vmem))))

    flops = 2 * n * l_out_pad * c_out * c_in * k
    in_bytes = (x_in.size * x_in.dtype.itemsize
                + w_in.size * w_in.dtype.itemsize)

    # ---- Pass 1: conv + activation, partial BN statistics. -------------------
    sums, sqs = pl.pallas_call(
        functools.partial(_stats_kernel, l_tile=tl, apply_relu=apply_relu),
        out_shape=(jax.ShapeDtypeStruct((n, n_lt, c_out, 1), jnp.float32),
                   jax.ShapeDtypeStruct((n, n_lt, c_out, 1), jnp.float32)),
        grid=grid,
        in_specs=[x_spec, w_spec],
        out_specs=(stat_spec, stat_spec),
        compiler_params=compiler_params,
        cost_estimate=pl.CostEstimate(
            flops=flops, transcendentals=0,
            bytes_accessed=in_bytes + 2 * n * n_lt * c_out * 4),
    )(x_in, w_in)

    # Fold batch statistics + affine params into one scale/shift (f32).
    # NOTE: var = E[y^2] - mean^2 in f32, clamped at 0 (cancellation guard).
    total = jnp.sum(sums, axis=(0, 1))        # (C_out, 1)
    total_sq = jnp.sum(sqs, axis=(0, 1))      # (C_out, 1)
    mean = total / m_count
    var = jnp.maximum(total_sq / m_count - mean * mean, 0.0)
    inv = jax.lax.rsqrt(var + BN_EPS)
    g = gamma.astype(jnp.float32).reshape(c_out, 1)
    b = beta.astype(jnp.float32).reshape(c_out, 1)
    scale = g * inv
    shift = b - mean * scale

    # ---- Pass 2: recompute conv + activation, apply folded BN, NCL output. ---
    out = pl.pallas_call(
        functools.partial(_apply_kernel, l_tile=tl, apply_relu=apply_relu),
        out_shape=jax.ShapeDtypeStruct((n, c_out, l_out_pad), jnp.float32),
        grid=grid,
        in_specs=[x_spec, w_spec, vec_spec, vec_spec],
        out_specs=out_spec,
        compiler_params=compiler_params,
        cost_estimate=pl.CostEstimate(
            flops=flops + 2 * n * c_out * l_out_pad, transcendentals=0,
            bytes_accessed=in_bytes + 2 * c_out * 4 + n * c_out * l_out_pad * 4),
    )(x_in, w_in, scale, shift)

    if l_out_pad != l_out:
        out = out[:, :, :l_out]
    return out


def _reference(x, weight, gamma, beta, *, stride, padding):
    # Pure-JAX reference with the same mixed-precision policy
    # (bf16 conv operands, f32 accumulation, f32 BN math).
    y = jax.lax.conv_general_dilated(
        x.astype(jnp.bfloat16), weight.astype(jnp.bfloat16),
        window_strides=(stride,), padding=[(padding, padding)],
        dimension_numbers=("NCH", "OIH", "NCH"),
        preferred_element_type=jnp.float32)
    y = jnp.maximum(y, 0.0)
    mean = jnp.mean(y, axis=(0, 2), keepdims=True)
    var = jnp.mean((y - mean) ** 2, axis=(0, 2), keepdims=True)
    y_hat = (y - mean) * jax.lax.rsqrt(var + BN_EPS)
    return y_hat * gamma.reshape(1, -1, 1) + beta.reshape(1, -1, 1)


if __name__ == "__main__":
    # Module config: BatchNormConv1d(4, 8, kernel_size=3, stride=1, padding=1,
    # activation=ReLU), training-mode BatchNorm1d.
    in_dim, out_dim, kernel_size, stride, padding = 4, 8, 3, 1, 1
    batch, length = 2, 16

    key = jax.random.PRNGKey(0)
    kx, kw, kg, kb = jax.random.split(key, 4)
    x = jax.random.normal(kx, (batch, in_dim, length), dtype=jnp.float32)
    weight = jax.random.normal(kw, (out_dim, in_dim, kernel_size),
                               dtype=jnp.float32) * 0.2
    gamma = 1.0 + 0.1 * jax.random.normal(kg, (out_dim,), dtype=jnp.float32)
    beta = 0.1 * jax.random.normal(kb, (out_dim,), dtype=jnp.float32)

    out = batchnorm_conv1d(x, weight, gamma, beta,
                           stride=stride, padding=padding, apply_relu=True)
    out = jax.block_until_ready(out)

    ref = _reference(x, weight, gamma, beta, stride=stride, padding=padding)
    l_out = (length + 2 * padding - kernel_size) // stride + 1
    assert out.shape == (batch, out_dim, l_out), out.shape
    max_err = float(jnp.max(jnp.abs(out - ref)))
    assert jnp.allclose(out, ref, atol=2e-3, rtol=2e-3), max_err

    print("KERNEL_OK")
</pallas_src>

<mosaic_0001>
module attributes {stable_mosaic.version = 11 : i64} {
  func.func @_stats_kernel(%arg0: i32, %arg1: memref<1x4x18xbf16, #tpu.memory_space<vmem>>, %arg2: memref<3x8x4xbf16, #tpu.memory_space<vmem>>, %arg3: memref<1x1x8x1xf32, #tpu.memory_space<vmem>>, %arg4: memref<1x1x8x1xf32, #tpu.memory_space<vmem>>) attributes {dimension_semantics = [#tpu.dimension_semantics<parallel>], iteration_bounds = array<i64: 2>, scalar_prefetch = 0 : i64, scratch_operands = 0 : i64, tpu.core_type = #tpu.core_type<tc>, window_params = [{transform_indices = @transform_0, window_bounds = array<i64: 1, 4, 18>}, {pipeline_mode = #tpu.pipeline_mode<synchronous>, transform_indices = @transform_1, window_bounds = array<i64: 3, 8, 4>}, {transform_indices = @transform_2, window_bounds = array<i64: 1, 1, 8, 1>}, {transform_indices = @transform_3, window_bounds = array<i64: 1, 1, 8, 1>}]} {
    %cst = arith.constant 0.000000e+00 : f32
    %0 = vector.broadcast %cst : f32 to vector<8x16xf32>
    %c0 = arith.constant 0 : index
    %c0_0 = arith.constant 0 : index
    %c0_1 = arith.constant 0 : index
    %1 = vector.load %arg1[%c0, %c0_0, %c0_1] : memref<1x4x18xbf16, #tpu.memory_space<vmem>>, vector<1x4x16xbf16>
    %2 = vector.shape_cast %1 : vector<1x4x16xbf16> to vector<4x16xbf16>
    %c0_2 = arith.constant 0 : index
    %c0_3 = arith.constant 0 : index
    %c0_4 = arith.constant 0 : index
    %3 = vector.load %arg2[%c0_2, %c0_3, %c0_4] : memref<3x8x4xbf16, #tpu.memory_space<vmem>>, vector<1x8x4xbf16>
    %4 = vector.shape_cast %3 : vector<1x8x4xbf16> to vector<8x4xbf16>
    %cst_5 = arith.constant dense<0.000000e+00> : vector<8x16xf32>
    %5 = tpu.matmul %4, %2, %cst_5 {dimension_numbers = #tpu.dot_dimension_numbers<[1], [0], [0], [1], [0, 0, 1, 1], [], []>} : vector<8x4xbf16>, vector<4x16xbf16>, vector<8x16xf32> -> vector<8x16xf32>
    %6 = arith.addf %0, %5 : vector<8x16xf32>
    %c0_6 = arith.constant 0 : index
    %c0_7 = arith.constant 0 : index
    %c1 = arith.constant 1 : index
    %7 = vector.load %arg1[%c0_6, %c0_7, %c1] : memref<1x4x18xbf16, #tpu.memory_space<vmem>>, vector<1x4x16xbf16>
    %8 = vector.shape_cast %7 : vector<1x4x16xbf16> to vector<4x16xbf16>
    %c1_8 = arith.constant 1 : index
    %c0_9 = arith.constant 0 : index
    %c0_10 = arith.constant 0 : index
    %9 = vector.load %arg2[%c1_8, %c0_9, %c0_10] : memref<3x8x4xbf16, #tpu.memory_space<vmem>>, vector<1x8x4xbf16>
    %10 = vector.shape_cast %9 : vector<1x8x4xbf16> to vector<8x4xbf16>
    %cst_11 = arith.constant dense<0.000000e+00> : vector<8x16xf32>
    %11 = tpu.matmul %10, %8, %cst_11 {dimension_numbers = #tpu.dot_dimension_numbers<[1], [0], [0], [1], [0, 0, 1, 1], [], []>} : vector<8x4xbf16>, vector<4x16xbf16>, vector<8x16xf32> -> vector<8x16xf32>
    %12 = arith.addf %6, %11 : vector<8x16xf32>
    %c0_12 = arith.constant 0 : index
    %c0_13 = arith.constant 0 : index
    %c2 = arith.constant 2 : index
    %13 = vector.load %arg1[%c0_12, %c0_13, %c2] : memref<1x4x18xbf16, #tpu.memory_space<vmem>>, vector<1x4x16xbf16>
    %14 = vector.shape_cast %13 : vector<1x4x16xbf16> to vector<4x16xbf16>
    %c2_14 = arith.constant 2 : index
    %c0_15 = arith.constant 0 : index
    %c0_16 = arith.constant 0 : index
    %15 = vector.load %arg2[%c2_14, %c0_15, %c0_16] : memref<3x8x4xbf16, #tpu.memory_space<vmem>>, vector<1x8x4xbf16>
    %16 = vector.shape_cast %15 : vector<1x8x4xbf16> to vector<8x4xbf16>
    %cst_17 = arith.constant dense<0.000000e+00> : vector<8x16xf32>
    %17 = tpu.matmul %16, %14, %cst_17 {dimension_numbers = #tpu.dot_dimension_numbers<[1], [0], [0], [1], [0, 0, 1, 1], [], []>} : vector<8x4xbf16>, vector<4x16xbf16>, vector<8x16xf32> -> vector<8x16xf32>
    %18 = arith.addf %12, %17 : vector<8x16xf32>
    %cst_18 = arith.constant 0.000000e+00 : f32
    %19 = vector.broadcast %cst_18 : f32 to vector<8x16xf32>
    %20 = arith.maximumf %18, %19 : vector<8x16xf32>
    %cst_19 = arith.constant dense<0.000000e+00> : vector<8xf32>
    %21 = vector.multi_reduction <add>, %20, %cst_19 [1] : vector<8x16xf32> to vector<8xf32>
    %22 = vector.shape_cast %21 : vector<8xf32> to vector<8x1xf32>
    %23 = vector.shape_cast %22 : vector<8x1xf32> to vector<1x1x8x1xf32>
    %c0_20 = arith.constant 0 : index
    %c0_21 = arith.constant 0 : index
    %c0_22 = arith.constant 0 : index
    %c0_23 = arith.constant 0 : index
    %24 = vector.load %arg3[%c0_20, %c0_21, %c0_22, %c0_23] : memref<1x1x8x1xf32, #tpu.memory_space<vmem>>, vector<1x1x8x1xf32>
    tpu.vector_store %arg3[%c0_20, %c0_21, %c0_22, %c0_23], %23 {strides = array<i32>} : memref<1x1x8x1xf32, #tpu.memory_space<vmem>>, vector<1x1x8x1xf32>,
    %25 = arith.mulf %20, %20 : vector<8x16xf32>
    %cst_24 = arith.constant dense<0.000000e+00> : vector<8xf32>
    %26 = vector.multi_reduction <add>, %25, %cst_24 [1] : vector<8x16xf32> to vector<8xf32>
    %27 = vector.shape_cast %26 : vector<8xf32> to vector<8x1xf32>
    %28 = vector.shape_cast %27 : vector<8x1xf32> to vector<1x1x8x1xf32>
    %c0_25 = arith.constant 0 : index
    %c0_26 = arith.constant 0 : index
    %c0_27 = arith.constant 0 : index
    %c0_28 = arith.constant 0 : index
    %29 = vector.load %arg4[%c0_25, %c0_26, %c0_27, %c0_28] : memref<1x1x8x1xf32, #tpu.memory_space<vmem>>, vector<1x1x8x1xf32>
    tpu.vector_store %arg4[%c0_25, %c0_26, %c0_27, %c0_28], %28 {strides = array<i32>} : memref<1x1x8x1xf32, #tpu.memory_space<vmem>>, vector<1x1x8x1xf32>,
    return
  }
  func.func @transform_0(%arg0: i32) -> (i32, i32, i32) {
    %c0_i32 = arith.constant 0 : i32
    %c0_i32_0 = arith.constant 0 : i32
    %c0_i32_1 = arith.constant 0 : i32
    return %arg0, %c0_i32, %c0_i32_0 : i32, i32, i32
  }
  func.func @transform_1(%arg0: i32) -> (i32, i32, i32) {
    %c0_i32 = arith.constant 0 : i32
    %c0_i32_0 = arith.constant 0 : i32
    %c0_i32_1 = arith.constant 0 : i32
    %c0_i32_2 = arith.constant 0 : i32
    return %c0_i32, %c0_i32_0, %c0_i32_1 : i32, i32, i32
  }
  func.func @transform_2(%arg0: i32) -> (i32, i32, i32, i32) {
    %c0_i32 = arith.constant 0 : i32
    %c0_i32_0 = arith.constant 0 : i32
    %c0_i32_1 = arith.constant 0 : i32
    %c0_i32_2 = arith.constant 0 : i32
    return %arg0, %c0_i32, %c0_i32_0, %c0_i32_1 : i32, i32, i32, i32
  }
  func.func @transform_3(%arg0: i32) -> (i32, i32, i32, i32) {
    %c0_i32 = arith.constant 0 : i32
    %c0_i32_0 = arith.constant 0 : i32
    %c0_i32_1 = arith.constant 0 : i32
    %c0_i32_2 = arith.constant 0 : i32
    return %arg0, %c0_i32, %c0_i32_0, %c0_i32_1 : i32, i32, i32, i32
  }
}

</mosaic_0001>

<llo_original>
// kernel: tpu_custom_call.1
$region0: #{tpu_custom_call.1}
  #allocation0 [shape = 'u32[]', space=smem, size = 0x4, offset = 0x4, fixed_abs, tag = 'smem constant byte address 0x4 - core index']
  #allocation1 [shape = 'u32[144,128]{1,0:T(1,128)}', space=vmem, size = 0x12000, scoped, tag = 'internal scratch']
  %s0 = inlined_call_operand.vmem [shape: bf16[2,4,18], index: 0, kind: input, shape index: {}]
  %s1 = inlined_call_operand.vmem [shape: bf16[3,8,4], index: 1, kind: input, shape index: {}]
  %s2 = inlined_call_operand.vmem [shape: f32[2,1,8,1], index: 2, kind: output, shape index: {0}]
  %s3 = inlined_call_operand.vmem [shape: f32[2,1,8,1], index: 3, kind: output, shape index: {1}]
  %4 = xla_tuple %s2, %s3
  %s5 = sld [smem:[#allocation0]]
  $region49: #{tpu_custom_call.1} parent=0
    _
  %s7 = ssub.s32 1, %s5
  %s8 = scalar_select 0, %s7, %s5
  loop: start=0, step=1, limit=4
  $region2: #{tpu_custom_call.1} parent=0 // loop_pre_header
    _
  $region3: #{tpu_custom_call.1} parent=0 // loop_header
    %s10 = sphi 0, %s14
    %p11 = scmp.ge.s32.totalorder %s10, 4
    %s20 = sphi 0, %s22
    %s23 = sphi 0, %s20
    %s24 = sphi 0, %s23
    %s40 = sphi 0, %s24
    %s44 = sphi 0, %s44
    %s46 = sphi 0, %s44
    %s47 = sphi 0, %s46
    %s61 = sphi 0, %s47
    %s67 = sphi 0, %s69
    %s70 = sphi 0, %s67
    %s71 = sphi 0, %s70
    %s87 = sphi 0, %s71
    %s93 = sphi 0, %s95
    %s96 = sphi 0, %s93
    %s97 = sphi 0, %s96
    %s113 = sphi 0, %s97
  $region4: #{tpu_custom_call.1} parent=0 // loop_header_branch
    %13 = sbr.rel (%p11) target = $region8
  $region5: #{tpu_custom_call.1} parent=0 // loop_body
    %s15 = ssub.s32 %s10, 1
    %s16 = ssub.s32 %s10, 2
    %s17 = sadd.s32 %s10, 1
    %s18 = ssub.s32 %s10, %s17
    %p19 = scmp.eq.s32.totalorder %s18, 0
    %s21 = sadd.s32 %s20, 1
    %s22 = scalar_select %p19, %s20, %s21
    %p25 = pneg %p19
    %p26 = scmp.eq.s32.totalorder %s10, 1
    %p27 = por %p25, %p26
    %p28 = scmp.ne.s32.totalorder %s20, %s23
    %p29 = scmp.eq.s32.totalorder %s10, 0
    %p30 = por %p28, %p29
    %p31 = scmp.ne.s32.totalorder %s20, %s23
    %p32 = scmp.eq.s32.totalorder %s15, 1
    %p33 = por %p31, %p32
    %p34 = scmp.ne.s32.totalorder %s23, %s24
    %p35 = scmp.eq.s32.totalorder %s15, 0
    %p36 = por %p34, %p35
    %p37 = scmp.ne.s32.totalorder %s23, %s24
    %p38 = scmp.eq.s32.totalorder %s16, 1
    %p39 = por %p37, %p38
    %p41 = scmp.ne.s32.totalorder %s24, %s40
    %p42 = scmp.eq.s32.totalorder %s16, 0
    %p43 = por %p41, %p42
    %s45 = sadd.s32 %s44, 1
    %p48 = scmp.eq.s32.totalorder %s10, 1
    %p49 = scmp.ne.s32.totalorder %s44, %s46
    %p50 = scmp.eq.s32.totalorder %s10, 0
    %p51 = por %p49, %p50
    %p52 = scmp.ne.s32.totalorder %s44, %s46
    %p53 = scmp.eq.s32.totalorder %s15, 1
    %p54 = por %p52, %p53
    %p55 = scmp.ne.s32.totalorder %s46, %s47
    %p56 = scmp.eq.s32.totalorder %s15, 0
    %p57 = por %p55, %p56
    %p58 = scmp.ne.s32.totalorder %s46, %s47
    %p59 = scmp.eq.s32.totalorder %s16, 1
    %p60 = por %p58, %p59
    %p62 = scmp.ne.s32.totalorder %s47, %s61
    %p63 = scmp.eq.s32.totalorder %s16, 0
    %p64 = por %p62, %p63
    %s65 = ssub.s32 %s10, %s17
    %p66 = scmp.eq.s32.totalorder %s65, 0
    %s68 = sadd.s32 %s67, 1
    %s69 = scalar_select %p66, %s67, %s68
    %p72 = pneg %p66
    %p73 = scmp.eq.s32.totalorder %s10, 1
    %p74 = por %p72, %p73
    %p75 = scmp.ne.s32.totalorder %s67, %s70
    %p76 = scmp.eq.s32.totalorder %s10, 0
    %p77 = por %p75, %p76
    %p78 = scmp.ne.s32.totalorder %s67, %s70
    %p79 = scmp.eq.s32.totalorder %s15, 1
    %p80 = por %p78, %p79
    %p81 = scmp.ne.s32.totalorder %s70, %s71
    %p82 = scmp.eq.s32.totalorder %s15, 0
    %p83 = por %p81, %p82
    %p84 = scmp.ne.s32.totalorder %s70, %s71
    %p85 = scmp.eq.s32.totalorder %s16, 1
    %p86 = por %p84, %p85
    %p88 = scmp.ne.s32.totalorder %s71, %s87
    %p89 = scmp.eq.s32.totalorder %s16, 0
    %p90 = por %p88, %p89
    %s91 = ssub.s32 %s10, %s17
    %p92 = scmp.eq.s32.totalorder %s91, 0
    %s94 = sadd.s32 %s93, 1
    %s95 = scalar_select %p92, %s93, %s94
    %p98 = pneg %p92
    %p99 = scmp.eq.s32.totalorder %s10, 1
    %p100 = por %p98, %p99
    %p101 = scmp.ne.s32.totalorder %s93, %s96
    %p102 = scmp.eq.s32.totalorder %s10, 0
    %p103 = por %p101, %p102
    %p104 = scmp.ne.s32.totalorder %s93, %s96
    %p105 = scmp.eq.s32.totalorder %s15, 1
    %p106 = por %p104, %p105
    %p107 = scmp.ne.s32.totalorder %s96, %s97
    %p108 = scmp.eq.s32.totalorder %s15, 0
    %p109 = por %p107, %p108
    %p110 = scmp.ne.s32.totalorder %s96, %s97
    %p111 = scmp.eq.s32.totalorder %s16, 1
    %p112 = por %p110, %p111
    %p114 = scmp.ne.s32.totalorder %s97, %s113
    %p115 = scmp.eq.s32.totalorder %s16, 0
    %p116 = por %p114, %p115
    %p117 = scmp.le.s32.totalorder 1, %s10
    %p118 = scmp.lt.s32.totalorder %s10, 3
    %p119 = pnand %p117, %p118
    %p120 = pneg %p119
    // Predicated region
    $region9: #{tpu_custom_call.1} parent=5 // pred_check
      _
    $region10: #{tpu_custom_call.1} parent=5 // pred_check_branch
      %122 = sbr.rel (%p119) target = $region12
    $region11: #{tpu_custom_call.1} parent=5 // pred_region
      %s123 = ssub.s32 %s10, 1
      // Predicated region
      $region13: #{tpu_custom_call.1} parent=11 // pred_check
        %p124 = pneg %p57
      $region14: #{tpu_custom_call.1} parent=11 // pred_check_branch
        %126 = sbr.rel (%p124) target = $region16
      $region15: #{tpu_custom_call.1} parent=11 // pred_region
        _
      $region16: #{tpu_custom_call.1} parent=11 // pred_fallthru
        _
    $region12: #{tpu_custom_call.1} parent=5 // pred_fallthru
      _
    %p127 = scmp.lt.s32.totalorder %s10, 2
    // Predicated region
    $region17: #{tpu_custom_call.1} parent=5 // pred_check
      %p128 = pneg %p127
    $region18: #{tpu_custom_call.1} parent=5 // pred_check_branch
      %130 = sbr.rel (%p128) target = $region20
    $region19: #{tpu_custom_call.1} parent=5 // pred_region
      // Predicated region
      $region21: #{tpu_custom_call.1} parent=19 // pred_check
        %p131 = pneg %p30
      $region22: #{tpu_custom_call.1} parent=19 // pred_check_branch
        %133 = sbr.rel (%p131) target = $region24
      $region23: #{tpu_custom_call.1} parent=19 // pred_region
        %p134 = scmp.lt.s32.totalorder %s10, 1
        %s135 = scalar_select %p134, %s10, 1
        %s136 = smul.addr %s135, 2
        %s137 = scalar_lea.vmem %s0, %s136
      $region24: #{tpu_custom_call.1} parent=19 // pred_fallthru
        _
    $region20: #{tpu_custom_call.1} parent=5 // pred_fallthru
      _
    %p138 = scmp.le.s32.totalorder 1, %s10
    %p139 = scmp.lt.s32.totalorder %s10, 3
    %p140 = pnand %p138, %p139
    %p141 = pneg %p140
    // Predicated region
    $region25: #{tpu_custom_call.1} parent=5 // pred_check
      _
    $region26: #{tpu_custom_call.1} parent=5 // pred_check_branch
      %143 = sbr.rel (%p140) target = $region28
    $region27: #{tpu_custom_call.1} parent=5 // pred_region
      %s144 = ssub.s32 %s10, 1
      %p145 = scmp.lt.s32.totalorder %s15, 1
      %s146 = scalar_select %p145, %s15, 1
      %s147 = smul.addr %s146, 2
      %s148 = scalar_lea.vmem %s0, %s147
      %p149 = pneg %p36
      %p150 = pneg %p33
      %p151 = pneg %p57
      %p152 = pneg %p54
      %p153 = pneg %p83
      %p154 = pneg %p80
      %p155 = scmp.lt.s32.totalorder %s15, 1
      %s156 = scalar_select %p155, %s15, 1
      %s157 = smul.addr %s156, 8
      %s158 = scalar_lea.vmem %s2, %s157
      %p159 = pneg %p109
      %p160 = pneg %p106
      %p161 = scmp.lt.s32.totalorder %s15, 1
      %s162 = scalar_select %p161, %s15, 1
      %s163 = smul.addr %s162, 8
      %s164 = scalar_lea.vmem %s3, %s163
      %p165 = scmp.lt.s32.totalorder %s15, 1
      %s166 = scalar_select %p165, %s15, 1
      %s167 = smul.addr %s166, 2
      %s168 = scalar_lea.vmem %s0, %s167
      %p169 = scmp.lt.s32.totalorder %s15, 1
      %s170 = scalar_select %p169, %s15, 1
      %s171 = smul.addr %s170, 8
      %s172 = scalar_lea.vmem %s2, %s171
      %p173 = scmp.lt.s32.totalorder %s15, 1
      %s174 = scalar_select %p173, %s15, 1
      %s175 = smul.addr %s174, 8
      %s176 = scalar_lea.vmem %s3, %s175
      %v178 = vld [vmem:[%s168] sm:$0x3]
      %v179 = vld [vmem:[%s1] sm:$0xf]
      %s180 = scalar_lea.vmem %s1, 4
      %v181 = vld [vmem:[%s180] sm:$0xf]
      %v184 = vunpack.c.l.s4 1983009808
      %v185 = vunpack.c.0.s8 %v184
      %v186 = vlaneseq
      %v187 = vshrl.u32 %v186, 7
      %v188 = vsub.s32 %v185, %v187
      %v189 = vrot.slane %v178, %v188
      %190 = vrot.lane.b32.xlu0 %v189, 127
      %v191 = vpop.permute.xlu0 %190
      %vm192 = vcmask 31744
      %v194 = vsel %vm192, %v181, 0
      %vm196 = vcmask 1041408
      %v198 = vsel %vm196, %v191, 0
      %200 = vmatprep.subr.bf16.mxu0 0
      %201 = vmatpush1.bf16.msra.mxu0 0
      %202 = vmatprep.subr.bf16.mxu0 0
      %203 = vmatpush1.bf16.msra.mxu0 0
      %204 = vmatprep.subr.bf16.mxu0 0
      %205 = vmatpush1.bf16.msra.mxu0 0
      %206 = vmatprep.subr.bf16.mxu0 0
      %207 = vmatpush1.bf16.msra.mxu0 0
      %208 = vmatprep.subr.bf16.mxu0 0
      %209 = vmatpush1.bf16.msra.mxu0 0
      %210 = vmatprep.subr.bf16.mxu0 0
      %211 = vmatpush1.bf16.msra.mxu0 0
      %212 = vmatprep.subr.bf16.mxu0 0
      %213 = vmatpush1.bf16.msra.mxu0 0
      %214 = vmatprep.subr.bf16.mxu0 0
      %215 = vmatpush1.bf16.msra.mxu0 %v198
      %216 = vmatprep.subr.bf16.mxu0 0
      %217 = vmatpush2.bf16.msra.mxu0 0
      %218 = vmatprep.subr.bf16.mxu0 0
      %219 = vmatpush2.bf16.msra.mxu0 0
      %220 = vmatprep.subr.bf16.mxu0 0
      %221 = vmatpush2.bf16.msra.mxu0 0
      %222 = vmatprep.subr.bf16.mxu0 0
      %223 = vmatpush2.bf16.msra.mxu0 0
      %224 = vmatprep.subr.bf16.mxu0 0
      %225 = vmatpush2.bf16.msra.mxu0 0
      %226 = vmatprep.subr.bf16.mxu0 0
      %227 = vmatpush2.bf16.msra.mxu0 0
      %228 = vmatprep.subr.bf16.mxu0 0
      %229 = vmatpush2.bf16.msra.mxu0 0
      %230 = vmatprep.subr.bf16.mxu0 0
      %231 = vmatpush2.bf16.msra.mxu0 0
      %232 = vmatprep.mubr.bf16.mxu0 0
      %233 = vmatmul.mubr.bf16.gmra.mxu0 %v194
      %v234 = vpop.f32.mrf.mxu0
      %v235 = vadd.f32 0.0, %v234
      %v236 = vpop.f32.mrf.mxu0
      %v237 = vpop.f32.mrf.mxu0
      %v238 = vpop.f32.mrf.mxu0
      %239 = vdwg.mxu0
      %v241 = vsel %vm192, %v179, 0
      %v244 = vsel %vm196, %v178, 0
      %246 = vmatprep.subr.bf16.mxu0 0
      %247 = vmatpush1.bf16.msra.mxu0 0
      %248 = vmatprep.subr.bf16.mxu0 0
      %249 = vmatpush1.bf16.msra.mxu0 0
      %250 = vmatprep.subr.bf16.mxu0 0
      %251 = vmatpush1.bf16.msra.mxu0 0
      %252 = vmatprep.subr.bf16.mxu0 0
      %253 = vmatpush1.bf16.msra.mxu0 0
      %254 = vmatprep.subr.bf16.mxu0 0
      %255 = vmatpush1.bf16.msra.mxu0 0
      %256 = vmatprep.subr.bf16.mxu0 0
      %257 = vmatpush1.bf16.msra.mxu0 0
      %258 = vmatprep.subr.bf16.mxu0 0
      %259 = vmatpush1.bf16.msra.mxu0 0
      %260 = vmatprep.subr.bf16.mxu0 0
      %261 = vmatpush1.bf16.msra.mxu0 %v244
      %262 = vmatprep.subr.bf16.mxu0 0
      %263 = vmatpush2.bf16.msra.mxu0 0
      %264 = vmatprep.subr.bf16.mxu0 0
      %265 = vmatpush2.bf16.msra.mxu0 0
      %266 = vmatprep.subr.bf16.mxu0 0
      %267 = vmatpush2.bf16.msra.mxu0 0
      %268 = vmatprep.subr.bf16.mxu0 0
      %269 = vmatpush2.bf16.msra.mxu0 0
      %270 = vmatprep.subr.bf16.mxu0 0
      %271 = vmatpush2.bf16.msra.mxu0 0
      %272 = vmatprep.subr.bf16.mxu0 0
      %273 = vmatpush2.bf16.msra.mxu0 0
      %274 = vmatprep.subr.bf16.mxu0 0
      %275 = vmatpush2.bf16.msra.mxu0 0
      %276 = vmatprep.subr.bf16.mxu0 0
      %277 = vmatpush2.bf16.msra.mxu0 0
      %278 = vmatprep.mubr.bf16.mxu0 0
      %279 = vmatmul.mubr.bf16.gmra.mxu0 %v241
      %v280 = vpop.f32.mrf.mxu0
      %v281 = vadd.f32 %v235, %v280
      %v282 = vpop.f32.mrf.mxu0
      %v283 = vpop.f32.mrf.mxu0
      %v284 = vpop.f32.mrf.mxu0
      %285 = vdwg.mxu0
      %v286 = vld [vmem:[%s168] sm:$0x3]
      %s287 = scalar_lea.vmem %s1, 8
      %v288 = vld [vmem:[%s287] sm:$0xf]
      %v291 = vunpack.c.l.s4 1983009808
      %v292 = vunpack.c.0.s8 %v291
      %v293 = vlaneseq
      %v294 = vshrl.u32 %v293, 7
      %v295 = vsub.s32 %v292, %v294
      %v296 = vrot.slane %v286, %v295
      %297 = vrot.lane.b32.xlu0 %v296, 126
      %v298 = vpop.permute.xlu0 %297
      %v300 = vsel %vm192, %v288, 0
      %v303 = vsel %vm196, %v298, 0
      %305 = vmatprep.subr.bf16.mxu0 0
      %306 = vmatpush1.bf16.msra.mxu0 0
      %307 = vmatprep.subr.bf16.mxu0 0
      %308 = vmatpush1.bf16.msra.mxu0 0
      %309 = vmatprep.subr.bf16.mxu0 0
      %310 = vmatpush1.bf16.msra.mxu0 0
      %311 = vmatprep.subr.bf16.mxu0 0
      %312 = vmatpush1.bf16.msra.mxu0 0
      %313 = vmatprep.subr.bf16.mxu0 0
      %314 = vmatpush1.bf16.msra.mxu0 0
      %315 = vmatprep.subr.bf16.mxu0 0
      %316 = vmatpush1.bf16.msra.mxu0 0
      %317 = vmatprep.subr.bf16.mxu0 0
      %318 = vmatpush1.bf16.msra.mxu0 0
      %319 = vmatprep.subr.bf16.mxu0 0
      %320 = vmatpush1.bf16.msra.mxu0 %v303
      %321 = vmatprep.subr.bf16.mxu0 0
      %322 = vmatpush2.bf16.msra.mxu0 0
      %323 = vmatprep.subr.bf16.mxu0 0
      %324 = vmatpush2.bf16.msra.mxu0 0
      %325 = vmatprep.subr.bf16.mxu0 0
      %326 = vmatpush2.bf16.msra.mxu0 0
      %327 = vmatprep.subr.bf16.mxu0 0
      %328 = vmatpush2.bf16.msra.mxu0 0
      %329 = vmatprep.subr.bf16.mxu0 0
      %330 = vmatpush2.bf16.msra.mxu0 0
      %331 = vmatprep.subr.bf16.mxu0 0
      %332 = vmatpush2.bf16.msra.mxu0 0
      %333 = vmatprep.subr.bf16.mxu0 0
      %334 = vmatpush2.bf16.msra.mxu0 0
      %335 = vmatprep.subr.bf16.mxu0 0
      %336 = vmatpush2.bf16.msra.mxu0 0
      %337 = vmatprep.mubr.bf16.mxu0 0
      %338 = vmatmul.mubr.bf16.gmra.mxu0 %v300
      %v339 = vpop.f32.mrf.mxu0
      %v340 = vadd.f32 0.0, %v339
      %v341 = vpop.f32.mrf.mxu0
      %v342 = vpop.f32.mrf.mxu0
      %v343 = vpop.f32.mrf.mxu0
      %344 = vdwg.mxu0
      %v345 = vadd.f32 %v281, %v340
      %v346 = vmax.f32 %v345, 0.0
      %vm347 = vcmask 130048
      %v348 = vsel %vm347, %v346, 0.0
      %349 = vadd.xlane.f32.xlu0 %v348
      %v350 = vpop.xlane.xlu0 %349
      %vm351 = vcmask 7168
      %352 = vst.msk [vmem:[%s172] sm:$0xff] %vm351, %v350
      %v353 = vmul.f32 %v346, %v346
      %v354 = vsel %vm347, %v353, 0.0
      %355 = vadd.xlane.f32.xlu0 %v354
      %v356 = vpop.xlane.xlu0 %355
      %357 = vst.msk [vmem:[%s176] sm:$0xff] %vm351, %v356
      %p358 = scmp.lt.s32.totalorder %s15, 1
      %s359 = scalar_select %p358, %s15, 1
      %s360 = smul.addr %s359, 8
      %s361 = scalar_lea.vmem %s2, %s360
      %p362 = scmp.lt.s32.totalorder %s15, 1
      %s363 = scalar_select %p362, %s15, 1
      %s364 = smul.addr %s363, 8
      %s365 = scalar_lea.vmem %s3, %s364
      // Predicated region
      $region29: #{tpu_custom_call.1} parent=27 // pred_check
        %p366 = pneg %p80
      $region30: #{tpu_custom_call.1} parent=27 // pred_check_branch
        %368 = sbr.rel (%p366) target = $region32
      $region31: #{tpu_custom_call.1} parent=27 // pred_region
        _
      $region32: #{tpu_custom_call.1} parent=27 // pred_fallthru
        _
      // Predicated region
      $region33: #{tpu_custom_call.1} parent=27 // pred_check
        %p369 = pneg %p106
      $region34: #{tpu_custom_call.1} parent=27 // pred_check_branch
        %371 = sbr.rel (%p369) target = $region36
      $region35: #{tpu_custom_call.1} parent=27 // pred_region
        _
      $region36: #{tpu_custom_call.1} parent=27 // pred_fallthru
        _
    $region28: #{tpu_custom_call.1} parent=5 // pred_fallthru
      _
    %p372 = scmp.le.s32.totalorder 2, %s10
    // Predicated region
    $region37: #{tpu_custom_call.1} parent=5 // pred_check
      %p373 = pneg %p372
    $region38: #{tpu_custom_call.1} parent=5 // pred_check_branch
      %375 = sbr.rel (%p373) target = $region40
    $region39: #{tpu_custom_call.1} parent=5 // pred_region
      %s376 = ssub.s32 %s10, 2
      // Predicated region
      $region41: #{tpu_custom_call.1} parent=39 // pred_check
        %p377 = pneg %p86
      $region42: #{tpu_custom_call.1} parent=39 // pred_check_branch
        %379 = sbr.rel (%p377) target = $region44
      $region43: #{tpu_custom_call.1} parent=39 // pred_region
        %p380 = scmp.lt.s32.totalorder %s16, 1
        %s381 = scalar_select %p380, %s16, 1
        %s382 = smul.addr %s381, 8
        %s383 = scalar_lea.vmem %s2, %s382
      $region44: #{tpu_custom_call.1} parent=39 // pred_fallthru
        _
      // Predicated region
      $region45: #{tpu_custom_call.1} parent=39 // pred_check
        %p384 = pneg %p112
      $region46: #{tpu_custom_call.1} parent=39 // pred_check_branch
        %386 = sbr.rel (%p384) target = $region48
      $region47: #{tpu_custom_call.1} parent=39 // pred_region
        %p387 = scmp.lt.s32.totalorder %s16, 1
        %s388 = scalar_select %p387, %s16, 1
        %s389 = smul.addr %s388, 8
        %s390 = scalar_lea.vmem %s3, %s389
      $region48: #{tpu_custom_call.1} parent=39 // pred_fallthru
        _
    $region40: #{tpu_custom_call.1} parent=5 // pred_fallthru
      _
  $region6: #{tpu_custom_call.1} parent=0 // loop_footer
    %s14 = sadd.s32 1, %s10
  $region7: #{tpu_custom_call.1} parent=0 // loop_footer_branch
    %9 = sbr.rel target = $region3
  $region8: #{tpu_custom_call.1} parent=0 // loop_exit
    _

</llo_original>
